<compile_context>
chip_gen: v7x
topology: tpu7x:2x2x1
jax: 0.10.0
libtpu: 0.0.40
codegen_flags: <defaults>
</compile_context>

<pallas_src>
import functools

import jax
import jax.numpy as jnp
from jax.experimental import pallas as pl
from jax.experimental.pallas import tpu as pltpu


def _round_up(n: int, m: int) -> int:
    return ((n + m - 1) // m) * m


def _sigmoid(z):
    # sigmoid(z) = 0.5 * (tanh(z/2) + 1): one EUP op instead of exp + reciprocal.
    return 0.5 * jnp.tanh(0.5 * z) + 0.5


def _make_lstm_kernel(has_hidden: bool, quantized: bool):
    """Kernel for one H-tile: gates -> nonlinearities -> (h', c') slices.

    Ref layout (per grid step j):
      xh_ref:    [Bp, Kcols] bf16   concat([x, h]) (or just x when hidden=None)
      w_ref:     [Kcols, 4*tn]      bf16 or int8, gate-interleaved [i|f|g|o]
      scale_ref: [1, 4*tn] f32      (only when quantized)
      c_ref:     [Bp, tn] f32       (only when has_hidden)
      h_out_ref: [Bp, tn] out_dtype
      c_out_ref: [Bp, tn] f32
    """

    def kernel(*refs):
        xh_ref, w_ref = refs[0], refs[1]
        if quantized:
            s_ref = refs[2]
            rest = refs[3:]
        else:
            s_ref = None
            rest = refs[2:]
        if has_hidden:
            c_ref, h_out_ref, c_out_ref = rest
        else:
            c_ref = None
            h_out_ref, c_out_ref = rest

        w = w_ref[...]
        if quantized:
            # int8 values are exactly representable in bf16; the per-column
            # scale is applied to the f32 gates after the MXU matmul.
            w = w.astype(jnp.float32).astype(jnp.bfloat16)
        gates = jnp.dot(xh_ref[...], w, preferred_element_type=jnp.float32)
        if quantized:
            gates = gates * s_ref[...]

        tn = h_out_ref.shape[-1]
        i_g = _sigmoid(gates[:, 0 * tn:1 * tn])
        g_g = jnp.tanh(gates[:, 2 * tn:3 * tn])
        o_g = _sigmoid(gates[:, 3 * tn:4 * tn])
        if has_hidden:
            f_g = _sigmoid(gates[:, 1 * tn:2 * tn])
            c_new = f_g * c_ref[...] + i_g * g_g
        else:
            # hidden=None => h = c = 0, forget term vanishes.
            c_new = i_g * g_g
        h_out_ref[...] = (o_g * jnp.tanh(c_new)).astype(h_out_ref.dtype)
        c_out_ref[...] = c_new

    return kernel


def prepare_mega_lstm_params(w_ih, w_hh, *, weight_dtype=jnp.bfloat16,
                             max_weight_block_bytes=2 * 1024 * 1024):
    """One-time weight preparation (off the per-call path).

    w_ih: [4H, I] (PyTorch LSTMCell layout, gate order i, f, g, o)
    w_hh: [4H, H]

    Produces a gate-interleaved, padded, pre-transposed weight
      w: [Kp, num_tiles * 4 * tn]
    where Kp = round_up(I,128) + round_up(H,128), the W_ih rows occupy [0, I)
    and the W_hh rows occupy [Ip, Ip+H) (128-aligned), and tile j's columns
    hold [i | f | g | o] for hidden columns [j*tn, (j+1)*tn).

    weight_dtype: jnp.bfloat16 (default) or jnp.int8 (weight-only quant with
    per-column scales; good for v5e/v6e where the kernel is weight-BW bound).
    """
    H4, I = w_ih.shape
    H = H4 // 4
    assert w_hh.shape == (H4, H)

    Ip = _round_up(I, 128)
    Hhp = _round_up(H, 128)
    Kp = Ip + Hhp

    itemsize = jnp.dtype(weight_dtype).itemsize
    # Largest 128-multiple tile with a <= max_weight_block_bytes weight block
    # (keeps 2x double-buffered blocks well inside scoped VMEM on every chip).
    tn = max(128, (max_weight_block_bytes // (Kp * 4 * itemsize)) // 128 * 128)
    tn = min(tn, _round_up(H, 128))
    Hp = _round_up(H, tn)
    num_tiles = Hp // tn

    wih_t = jnp.asarray(w_ih, jnp.float32).T   # [I, 4H]
    whh_t = jnp.asarray(w_hh, jnp.float32).T   # [H, 4H]

    # Per-gate padded [Kp, Hp] blocks (zeros elsewhere -> padded gates are 0).
    w4 = jnp.zeros((4, Kp, Hp), jnp.float32)
    for g in range(4):
        w4 = w4.at[g, :I, :H].set(wih_t[:, g * H:(g + 1) * H])
        w4 = w4.at[g, Ip:Ip + H, :H].set(whh_t[:, g * H:(g + 1) * H])

    # Gate-interleave: (g, k, j, t) -> (k, j, g, t) -> [Kp, num_tiles*4*tn].
    w_tiled = w4.reshape(4, Kp, num_tiles, tn)
    w_tiled = jnp.transpose(w_tiled, (1, 2, 0, 3)).reshape(Kp, 4 * Hp)

    quantized = jnp.dtype(weight_dtype) == jnp.dtype(jnp.int8)
    if quantized:
        absmax = jnp.max(jnp.abs(w_tiled), axis=0, keepdims=True)   # [1, 4*Hp]
        scales = (jnp.maximum(absmax, 1e-8) / 127.0).astype(jnp.float32)
        w_store = jnp.clip(jnp.round(w_tiled / scales), -127, 127).astype(jnp.int8)
    else:
        w_store = w_tiled.astype(weight_dtype)
        scales = None

    return {
        "w": w_store,
        "scales": scales,
        "input_size": I,
        "hidden_size": H,
        "tn": tn,
        "quantized": bool(quantized),
    }


@functools.partial(
    jax.jit,
    static_argnames=("input_size", "hidden_size", "tn", "quantized", "has_hidden"))
def _mega_lstm_step(w, scales, x, h, c, *, input_size, hidden_size, tn,
                    quantized, has_hidden):
    I, H = input_size, hidden_size
    B = x.shape[0]
    Ip = _round_up(I, 128)
    Kp = w.shape[0]
    Hp = w.shape[1] // 4
    num_tiles = Hp // tn
    Bp = _round_up(B, 16)            # bf16 sublane packing for the xh operand
    out_dtype = x.dtype

    # hidden=None fast path only streams the W_ih rows [0, Ip) of w.
    xh_cols = Kp if has_hidden else Ip

    xh = jnp.zeros((Bp, xh_cols), jnp.bfloat16)
    xh = xh.at[:B, :I].set(x.astype(jnp.bfloat16))
    if has_hidden:
        xh = xh.at[:B, Ip:Ip + H].set(h.astype(jnp.bfloat16))

    operands = [xh, w]
    in_specs = [
        pl.BlockSpec((Bp, xh_cols), lambda j: (0, 0)),        # resident
        pl.BlockSpec((xh_cols, 4 * tn), lambda j: (0, j)),    # streamed/tiled
    ]
    if quantized:
        operands.append(scales)
        in_specs.append(pl.BlockSpec((1, 4 * tn), lambda j: (0, j)))
    if has_hidden:
        c_pad = jnp.zeros((Bp, Hp), jnp.float32).at[:B, :H].set(
            c.astype(jnp.float32))
        operands.append(c_pad)
        in_specs.append(pl.BlockSpec((Bp, tn), lambda j: (0, j)))

    out_specs = (pl.BlockSpec((Bp, tn), lambda j: (0, j)),
                 pl.BlockSpec((Bp, tn), lambda j: (0, j)))
    out_shape = (jax.ShapeDtypeStruct((Bp, Hp), out_dtype),     # h'
                 jax.ShapeDtypeStruct((Bp, Hp), jnp.float32))   # c' kept in f32

    w_bytes = xh_cols * 4 * Hp * w.dtype.itemsize
    cost = pl.CostEstimate(
        flops=2 * Bp * xh_cols * 4 * Hp,
        transcendentals=5 * Bp * Hp,
        bytes_accessed=int(
            w_bytes
            + Bp * xh_cols * 2
            + Bp * Hp * (jnp.dtype(out_dtype).itemsize + 4)
            + (4 * Hp * 4 if quantized else 0)
            + (Bp * Hp * 4 if has_hidden else 0)),
    )

    h_pad, c_out = pl.pallas_call(
        _make_lstm_kernel(has_hidden=has_hidden, quantized=quantized),
        grid=(num_tiles,),
        in_specs=in_specs,
        out_specs=out_specs,
        out_shape=out_shape,
        compiler_params=pltpu.CompilerParams(
            dimension_semantics=("parallel",)),
        cost_estimate=cost,
    )(*operands)

    return h_pad[:B, :H], c_out[:B, :H]


def mega_lstm_forward(params, x, hidden=None):
    """Mirrors MegaLSTM.forward: returns (h_new, c_new)."""
    has_hidden = hidden is not None
    if has_hidden:
        h, c = hidden
    else:
        h, c = None, None
    return _mega_lstm_step(
        params["w"], params["scales"], x, h, c,
        input_size=params["input_size"], hidden_size=params["hidden_size"],
        tn=params["tn"], quantized=params["quantized"], has_hidden=has_hidden)


def _reference_lstm_cell(x, w_ih, w_hh, hidden=None):
    """Pure-JAX f32 reference matching torch.nn.LSTMCell(bias=False)."""
    B = x.shape[0]
    H = w_hh.shape[1]
    if hidden is None:
        h = jnp.zeros((B, H), x.dtype)
        c = jnp.zeros((B, H), x.dtype)
    else:
        h, c = hidden
    gates = x @ w_ih.T + h @ w_hh.T
    i, f, g, o = jnp.split(gates, 4, axis=-1)
    i, f, o = jax.nn.sigmoid(i), jax.nn.sigmoid(f), jax.nn.sigmoid(o)
    g = jnp.tanh(g)
    c_new = f * c + i * g
    h_new = o * jnp.tanh(c_new)
    return h_new, c_new


if __name__ == "__main__":
    batch = 2
    input_size = 16
    hidden_size = 32

    key = jax.random.PRNGKey(0)
    kx, kih, khh, kh, kc = jax.random.split(key, 5)

    bound = 1.0 / (hidden_size ** 0.5)
    w_ih = jax.random.uniform(kih, (4 * hidden_size, input_size),
                              minval=-bound, maxval=bound, dtype=jnp.float32)
    w_hh = jax.random.uniform(khh, (4 * hidden_size, hidden_size),
                              minval=-bound, maxval=bound, dtype=jnp.float32)

    x = jax.random.normal(kx, (batch, input_size), dtype=jnp.float32)
    h0 = jax.random.normal(kh, (batch, hidden_size), dtype=jnp.float32)
    c0 = jax.random.normal(kc, (batch, hidden_size), dtype=jnp.float32)

    h_ref, c_ref = _reference_lstm_cell(x, w_ih, w_hh, hidden=(h0, c0))
    h_ref0, c_ref0 = _reference_lstm_cell(x, w_ih, w_hh, hidden=None)

    # --- bf16 weight path (default) ----------------------------------------
    params = prepare_mega_lstm_params(w_ih, w_hh)

    h_new, c_new = mega_lstm_forward(params, x, hidden=(h0, c0))
    jax.block_until_ready((h_new, c_new))
    assert h_new.shape == (batch, hidden_size)
    assert c_new.shape == (batch, hidden_size)
    assert jnp.allclose(h_new, h_ref, atol=2e-2, rtol=2e-2)
    assert jnp.allclose(c_new, c_ref, atol=2e-2, rtol=2e-2)

    # hidden=None fast path (W_hh rows never DMA'd).
    h_n0, c_n0 = mega_lstm_forward(params, x, hidden=None)
    jax.block_until_ready((h_n0, c_n0))
    assert jnp.allclose(h_n0, h_ref0, atol=2e-2, rtol=2e-2)
    assert jnp.allclose(c_n0, c_ref0, atol=2e-2, rtol=2e-2)

    # --- int8 weight-only quantized path (v5e/v6e bandwidth saver) ----------
    params_q = prepare_mega_lstm_params(w_ih, w_hh, weight_dtype=jnp.int8)
    h_q, c_q = mega_lstm_forward(params_q, x, hidden=(h0, c0))
    jax.block_until_ready((h_q, c_q))
    assert jnp.allclose(h_q, h_ref, atol=6e-2, rtol=6e-2)
    assert jnp.allclose(c_q, c_ref, atol=6e-2, rtol=6e-2)

    print("KERNEL_OK")
</pallas_src>

<mosaic_0001>
module attributes {stable_mosaic.version = 11 : i64} {
  func.func @kernel(%arg0: i32, %arg1: memref<16x256xbf16, #tpu.memory_space<vmem>>, %arg2: memref<256x512xbf16, #tpu.memory_space<vmem>>, %arg3: memref<16x128xf32, #tpu.memory_space<vmem>>, %arg4: memref<16x128xf32, #tpu.memory_space<vmem>>, %arg5: memref<16x128xf32, #tpu.memory_space<vmem>>) attributes {dimension_semantics = [#tpu.dimension_semantics<parallel>], iteration_bounds = array<i64: 1>, scalar_prefetch = 0 : i64, scratch_operands = 0 : i64, tpu.core_type = #tpu.core_type<tc>, window_params = [{pipeline_mode = #tpu.pipeline_mode<synchronous>, transform_indices = @transform_0, window_bounds = array<i64: 16, 256>}, {transform_indices = @transform_1, window_bounds = array<i64: 256, 512>}, {transform_indices = @transform_2, window_bounds = array<i64: 16, 128>}, {transform_indices = @transform_3, window_bounds = array<i64: 16, 128>}, {transform_indices = @transform_4, window_bounds = array<i64: 16, 128>}]} {
    %c0 = arith.constant 0 : index
    %c0_0 = arith.constant 0 : index
    %0 = vector.load %arg2[%c0, %c0_0] : memref<256x512xbf16, #tpu.memory_space<vmem>>, vector<256x512xbf16>
    %c0_1 = arith.constant 0 : index
    %c0_2 = arith.constant 0 : index
    %1 = vector.load %arg1[%c0_1, %c0_2] : memref<16x256xbf16, #tpu.memory_space<vmem>>, vector<16x256xbf16>
    %cst = arith.constant dense<0.000000e+00> : vector<16x512xf32>
    %2 = tpu.matmul %1, %0, %cst {dimension_numbers = #tpu.dot_dimension_numbers<[1], [0], [0], [1], [0, 0, 1, 1], [], []>} : vector<16x256xbf16>, vector<256x512xbf16>, vector<16x512xf32> -> vector<16x512xf32>
    %3 = vector.extract_strided_slice %2 {offsets = [0, 0], sizes = [16, 128], strides = [1, 1]} : vector<16x512xf32> to vector<16x128xf32>
    %cst_3 = arith.constant 5.000000e-01 : f32
    %4 = vector.broadcast %cst_3 : f32 to vector<16x128xf32>
    %5 = arith.mulf %4, %3 : vector<16x128xf32>
    %6 = math.tanh %5 : vector<16x128xf32>
    %cst_4 = arith.constant 5.000000e-01 : f32
    %7 = vector.broadcast %cst_4 : f32 to vector<16x128xf32>
    %8 = arith.mulf %7, %6 : vector<16x128xf32>
    %cst_5 = arith.constant 5.000000e-01 : f32
    %9 = vector.broadcast %cst_5 : f32 to vector<16x128xf32>
    %10 = arith.addf %8, %9 : vector<16x128xf32>
    %11 = vector.extract_strided_slice %2 {offsets = [0, 256], sizes = [16, 128], strides = [1, 1]} : vector<16x512xf32> to vector<16x128xf32>
    %12 = math.tanh %11 : vector<16x128xf32>
    %13 = vector.extract_strided_slice %2 {offsets = [0, 384], sizes = [16, 128], strides = [1, 1]} : vector<16x512xf32> to vector<16x128xf32>
    %cst_6 = arith.constant 5.000000e-01 : f32
    %14 = vector.broadcast %cst_6 : f32 to vector<16x128xf32>
    %15 = arith.mulf %14, %13 : vector<16x128xf32>
    %16 = math.tanh %15 : vector<16x128xf32>
    %cst_7 = arith.constant 5.000000e-01 : f32
    %17 = vector.broadcast %cst_7 : f32 to vector<16x128xf32>
    %18 = arith.mulf %17, %16 : vector<16x128xf32>
    %cst_8 = arith.constant 5.000000e-01 : f32
    %19 = vector.broadcast %cst_8 : f32 to vector<16x128xf32>
    %20 = arith.addf %18, %19 : vector<16x128xf32>
    %21 = vector.extract_strided_slice %2 {offsets = [0, 128], sizes = [16, 128], strides = [1, 1]} : vector<16x512xf32> to vector<16x128xf32>
    %cst_9 = arith.constant 5.000000e-01 : f32
    %22 = vector.broadcast %cst_9 : f32 to vector<16x128xf32>
    %23 = arith.mulf %22, %21 : vector<16x128xf32>
    %24 = math.tanh %23 : vector<16x128xf32>
    %cst_10 = arith.constant 5.000000e-01 : f32
    %25 = vector.broadcast %cst_10 : f32 to vector<16x128xf32>
    %26 = arith.mulf %25, %24 : vector<16x128xf32>
    %cst_11 = arith.constant 5.000000e-01 : f32
    %27 = vector.broadcast %cst_11 : f32 to vector<16x128xf32>
    %28 = arith.addf %26, %27 : vector<16x128xf32>
    %c0_12 = arith.constant 0 : index
    %c0_13 = arith.constant 0 : index
    %29 = vector.load %arg3[%c0_12, %c0_13] : memref<16x128xf32, #tpu.memory_space<vmem>>, vector<16x128xf32>
    %30 = arith.mulf %28, %29 : vector<16x128xf32>
    %31 = arith.mulf %10, %12 : vector<16x128xf32>
    %32 = arith.addf %30, %31 : vector<16x128xf32>
    %33 = math.tanh %32 : vector<16x128xf32>
    %34 = arith.mulf %20, %33 : vector<16x128xf32>
    %c0_14 = arith.constant 0 : index
    %c0_15 = arith.constant 0 : index
    %35 = vector.load %arg4[%c0_14, %c0_15] : memref<16x128xf32, #tpu.memory_space<vmem>>, vector<16x128xf32>
    tpu.vector_store %arg4[%c0_14, %c0_15], %34 {strides = array<i32>} : memref<16x128xf32, #tpu.memory_space<vmem>>, vector<16x128xf32>,
    %c0_16 = arith.constant 0 : index
    %c0_17 = arith.constant 0 : index
    %36 = vector.load %arg5[%c0_16, %c0_17] : memref<16x128xf32, #tpu.memory_space<vmem>>, vector<16x128xf32>
    tpu.vector_store %arg5[%c0_16, %c0_17], %32 {strides = array<i32>} : memref<16x128xf32, #tpu.memory_space<vmem>>, vector<16x128xf32>,
    return
  }
  func.func @transform_0(%arg0: i32) -> (i32, i32) {
    %c0_i32 = arith.constant 0 : i32
    %c0_i32_0 = arith.constant 0 : i32
    %c0_i32_1 = arith.constant 0 : i32
    return %c0_i32, %c0_i32_0 : i32, i32
  }
  func.func @transform_1(%arg0: i32) -> (i32, i32) {
    %c0_i32 = arith.constant 0 : i32
    %c0_i32_0 = arith.constant 0 : i32
    return %c0_i32, %arg0 : i32, i32
  }
  func.func @transform_2(%arg0: i32) -> (i32, i32) {
    %c0_i32 = arith.constant 0 : i32
    %c0_i32_0 = arith.constant 0 : i32
    return %c0_i32, %arg0 : i32, i32
  }
  func.func @transform_3(%arg0: i32) -> (i32, i32) {
    %c0_i32 = arith.constant 0 : i32
    %c0_i32_0 = arith.constant 0 : i32
    return %c0_i32, %arg0 : i32, i32
  }
  func.func @transform_4(%arg0: i32) -> (i32, i32) {
    %c0_i32 = arith.constant 0 : i32
    %c0_i32_0 = arith.constant 0 : i32
    return %c0_i32, %arg0 : i32, i32
  }
}

</mosaic_0001>

<llo_original>
// kernel: _mega_lstm_step.1
$region0: #{_mega_lstm_step.1}
  #allocation0 [shape = 'u32[]', space=smem, size = 0x4, offset = 0x4, fixed_abs, tag = 'smem constant byte address 0x4 - core index']
  #allocation1 [shape = 'u32[144,128]{1,0:T(1,128)}', space=vmem, size = 0x12000, scoped, tag = 'internal scratch']
  %s0 = inlined_call_operand.vmem [shape: bf16[16,256], index: 0, kind: input, shape index: {}]
  %s1 = inlined_call_operand.hbm [shape: bf16[256,512], index: 1, kind: input, shape index: {}]
  %s2 = inlined_call_operand.vmem [shape: f32[16,128], index: 2, kind: input, shape index: {}]
  %s3 = inlined_call_operand.vmem [shape: f32[16,128], index: 3, kind: output, shape index: {0}]
  %s4 = inlined_call_operand.vmem [shape: f32[16,128], index: 4, kind: output, shape index: {1}]
  %5 = xla_tuple %s3, %s4
  %s6 = sld [smem:[#allocation0]]
  $region34: #{_mega_lstm_step.1} parent=0
    _
  %s8 = ssub.s32 1, %s6
  %s9 = scalar_select 0, %s8, %s6
  $region1: #{_mega_lstm_step.1} parent=0
    #allocation2 [shape = 'u8[262144]{0}', space=vmem, size = 0x40000, scoped, tag = 'input window, operand 1, single buffered']
    #allocation3 [shape = 's32[1]{0}', space=sflag, size = 0x4, scoped, tag = 'scoped memory for _mega_lstm_step.1']
    %10 = vsyncpa [#allocation3], 0
    // Predicated region
    $region2: #{_mega_lstm_step.1} parent=1 // pred_check
      _
    $region3: #{_mega_lstm_step.1} parent=1 // pred_check_branch
      %12 = sbr.rel (0) target = $region5
    $region4: #{_mega_lstm_step.1} parent=1 // pred_region
      _
    $region5: #{_mega_lstm_step.1} parent=1 // pred_fallthru
      _
    // Predicated region
    $region6: #{_mega_lstm_step.1} parent=1 // pred_check
      _
    $region7: #{_mega_lstm_step.1} parent=1 // pred_check_branch
      %14 = sbr.rel (0) target = $region9
    $region8: #{_mega_lstm_step.1} parent=1 // pred_region
      %s16 = ssub.s32 8192, 8192
      %17 = vsyncadd [#allocation3], %s16
      %s18 = sshll.u32 [#allocation2], 4
      %s19 = int_to_ptr.vmem [resolvable:$true] %s18
      %24 = dma.hbm_to_vmem [thread:$0]  %s1, 8192, %s19, [#allocation3], 256, 256, 16
    $region9: #{_mega_lstm_step.1} parent=1 // pred_fallthru
      _
    // Predicated region
    $region10: #{_mega_lstm_step.1} parent=1 // pred_check
      _
    $region11: #{_mega_lstm_step.1} parent=1 // pred_check_branch
      %26 = sbr.rel (0) target = $region13
    $region12: #{_mega_lstm_step.1} parent=1 // pred_region
      _
    $region13: #{_mega_lstm_step.1} parent=1 // pred_fallthru
      _
    // Predicated region
    $region14: #{_mega_lstm_step.1} parent=1 // pred_check
      _
    $region15: #{_mega_lstm_step.1} parent=1 // pred_check_branch
      %28 = sbr.rel (0) target = $region17
    $region16: #{_mega_lstm_step.1} parent=1 // pred_region
      %29 = dma.done [#allocation3], 8192
    $region17: #{_mega_lstm_step.1} parent=1 // pred_fallthru
      _
    %v30 = vld [vmem:[#allocation2] sm:$0xff]
    %v31 = vld [vmem:[#allocation2 + $0x8] sm:$0xff]
    %v32 = vld [vmem:[#allocation2 + $0x10] sm:$0xff]
    %v33 = vld [vmem:[#allocation2 + $0x18] sm:$0xff]
    %v34 = vld [vmem:[#allocation2 + $0x20] sm:$0xff]
    %v35 = vld [vmem:[#allocation2 + $0x28] sm:$0xff]
    %v36 = vld [vmem:[#allocation2 + $0x30] sm:$0xff]
    %v37 = vld [vmem:[#allocation2 + $0x38] sm:$0xff]
    %v38 = vld [vmem:[#allocation2 + $0x40] sm:$0xff]
    %v39 = vld [vmem:[#allocation2 + $0x48] sm:$0xff]
    %v40 = vld [vmem:[#allocation2 + $0x50] sm:$0xff]
    %v41 = vld [vmem:[#allocation2 + $0x58] sm:$0xff]
    %v42 = vld [vmem:[#allocation2 + $0x60] sm:$0xff]
    %v43 = vld [vmem:[#allocation2 + $0x68] sm:$0xff]
    %v44 = vld [vmem:[#allocation2 + $0x70] sm:$0xff]
    %v45 = vld [vmem:[#allocation2 + $0x78] sm:$0xff]
    %v46 = vld [vmem:[#allocation2 + $0x80] sm:$0xff]
    %v47 = vld [vmem:[#allocation2 + $0x88] sm:$0xff]
    %v48 = vld [vmem:[#allocation2 + $0x90] sm:$0xff]
    %v49 = vld [vmem:[#allocation2 + $0x98] sm:$0xff]
    %v50 = vld [vmem:[#allocation2 + $0xa0] sm:$0xff]
    %v51 = vld [vmem:[#allocation2 + $0xa8] sm:$0xff]
    %v52 = vld [vmem:[#allocation2 + $0xb0] sm:$0xff]
    %v53 = vld [vmem:[#allocation2 + $0xb8] sm:$0xff]
    %v54 = vld [vmem:[#allocation2 + $0xc0] sm:$0xff]
    %v55 = vld [vmem:[#allocation2 + $0xc8] sm:$0xff]
    %v56 = vld [vmem:[#allocation2 + $0xd0] sm:$0xff]
    %v57 = vld [vmem:[#allocation2 + $0xd8] sm:$0xff]
    %v58 = vld [vmem:[#allocation2 + $0xe0] sm:$0xff]
    %v59 = vld [vmem:[#allocation2 + $0xe8] sm:$0xff]
    %v60 = vld [vmem:[#allocation2 + $0xf0] sm:$0xff]
    %v61 = vld [vmem:[#allocation2 + $0xf8] sm:$0xff]
    %v62 = vld [vmem:[#allocation2 + $0x100] sm:$0xff]
    %v63 = vld [vmem:[#allocation2 + $0x108] sm:$0xff]
    %v64 = vld [vmem:[#allocation2 + $0x110] sm:$0xff]
    %v65 = vld [vmem:[#allocation2 + $0x118] sm:$0xff]
    %v66 = vld [vmem:[#allocation2 + $0x120] sm:$0xff]
    %v67 = vld [vmem:[#allocation2 + $0x128] sm:$0xff]
    %v68 = vld [vmem:[#allocation2 + $0x130] sm:$0xff]
    %v69 = vld [vmem:[#allocation2 + $0x138] sm:$0xff]
    %v70 = vld [vmem:[#allocation2 + $0x140] sm:$0xff]
    %v71 = vld [vmem:[#allocation2 + $0x148] sm:$0xff]
    %v72 = vld [vmem:[#allocation2 + $0x150] sm:$0xff]
    %v73 = vld [vmem:[#allocation2 + $0x158] sm:$0xff]
    %v74 = vld [vmem:[#allocation2 + $0x160] sm:$0xff]
    %v75 = vld [vmem:[#allocation2 + $0x168] sm:$0xff]
    %v76 = vld [vmem:[#allocation2 + $0x170] sm:$0xff]
    %v77 = vld [vmem:[#allocation2 + $0x178] sm:$0xff]
    %v78 = vld [vmem:[#allocation2 + $0x180] sm:$0xff]
    %v79 = vld [vmem:[#allocation2 + $0x188] sm:$0xff]
    %v80 = vld [vmem:[#allocation2 + $0x190] sm:$0xff]
    %v81 = vld [vmem:[#allocation2 + $0x198] sm:$0xff]
    %v82 = vld [vmem:[#allocation2 + $0x1a0] sm:$0xff]
    %v83 = vld [vmem:[#allocation2 + $0x1a8] sm:$0xff]
    %v84 = vld [vmem:[#allocation2 + $0x1b0] sm:$0xff]
    %v85 = vld [vmem:[#allocation2 + $0x1b8] sm:$0xff]
    %v86 = vld [vmem:[#allocation2 + $0x1c0] sm:$0xff]
    %v87 = vld [vmem:[#allocation2 + $0x1c8] sm:$0xff]
    %v88 = vld [vmem:[#allocation2 + $0x1d0] sm:$0xff]
    %v89 = vld [vmem:[#allocation2 + $0x1d8] sm:$0xff]
    %v90 = vld [vmem:[#allocation2 + $0x1e0] sm:$0xff]
    %v91 = vld [vmem:[#allocation2 + $0x1e8] sm:$0xff]
    %v92 = vld [vmem:[#allocation2 + $0x1f0] sm:$0xff]
    %v93 = vld [vmem:[#allocation2 + $0x1f8] sm:$0xff]
    %v94 = vld [vmem:[%s0] sm:$0xff]
    %v95 = vld [vmem:[%s0 + $0x8] sm:$0xff]
    %v98 = vunpack.c.l.b16 %v94
    %v99 = vunpack.c.h.b16 %v94
    %v100 = vunpack.c.l.b16 %v95
    %v101 = vunpack.c.h.b16 %v95
    %v102 = vpack.c.b16 %v100, %v98
    %v103 = vpack.c.b16 %v101, %v99
    %v170 = vunpack.c.l.b16 %v30
    %v171 = vunpack.c.h.b16 %v30
    %v172 = vunpack.c.l.b16 %v31
    %v173 = vunpack.c.h.b16 %v31
    %v174 = vunpack.c.l.b16 %v32
    %v175 = vunpack.c.h.b16 %v32
    %v176 = vunpack.c.l.b16 %v33
    %v177 = vunpack.c.h.b16 %v33
    %v178 = vunpack.c.l.b16 %v34
    %v179 = vunpack.c.h.b16 %v34
    %v180 = vunpack.c.l.b16 %v35
    %v181 = vunpack.c.h.b16 %v35
    %v182 = vunpack.c.l.b16 %v36
    %v183 = vunpack.c.h.b16 %v36
    %v184 = vunpack.c.l.b16 %v37
    %v185 = vunpack.c.h.b16 %v37
    %v186 = vunpack.c.l.b16 %v38
    %v187 = vunpack.c.h.b16 %v38
    %v188 = vunpack.c.l.b16 %v39
    %v189 = vunpack.c.h.b16 %v39
    %v190 = vunpack.c.l.b16 %v40
    %v191 = vunpack.c.h.b16 %v40
    %v192 = vunpack.c.l.b16 %v41
    %v193 = vunpack.c.h.b16 %v41
    %v194 = vunpack.c.l.b16 %v42
    %v195 = vunpack.c.h.b16 %v42
    %v196 = vunpack.c.l.b16 %v43
    %v197 = vunpack.c.h.b16 %v43
    %v198 = vunpack.c.l.b16 %v44
    %v199 = vunpack.c.h.b16 %v44
    %v200 = vunpack.c.l.b16 %v45
    %v201 = vunpack.c.h.b16 %v45
    %v202 = vunpack.c.l.b16 %v46
    %v203 = vunpack.c.h.b16 %v46
    %v204 = vunpack.c.l.b16 %v47
    %v205 = vunpack.c.h.b16 %v47
    %v206 = vunpack.c.l.b16 %v48
    %v207 = vunpack.c.h.b16 %v48
    %v208 = vunpack.c.l.b16 %v49
    %v209 = vunpack.c.h.b16 %v49
    %v210 = vunpack.c.l.b16 %v50
    %v211 = vunpack.c.h.b16 %v50
    %v212 = vunpack.c.l.b16 %v51
    %v213 = vunpack.c.h.b16 %v51
    %v214 = vunpack.c.l.b16 %v52
    %v215 = vunpack.c.h.b16 %v52
    %v216 = vunpack.c.l.b16 %v53
    %v217 = vunpack.c.h.b16 %v53
    %v218 = vunpack.c.l.b16 %v54
    %v219 = vunpack.c.h.b16 %v54
    %v220 = vunpack.c.l.b16 %v55
    %v221 = vunpack.c.h.b16 %v55
    %v222 = vunpack.c.l.b16 %v56
    %v223 = vunpack.c.h.b16 %v56
    %v224 = vunpack.c.l.b16 %v57
    %v225 = vunpack.c.h.b16 %v57
    %v226 = vunpack.c.l.b16 %v58
    %v227 = vunpack.c.h.b16 %v58
    %v228 = vunpack.c.l.b16 %v59
    %v229 = vunpack.c.h.b16 %v59
    %v230 = vunpack.c.l.b16 %v60
    %v231 = vunpack.c.h.b16 %v60
    %v232 = vunpack.c.l.b16 %v61
    %v233 = vunpack.c.h.b16 %v61
    %v234 = vunpack.c.l.b16 %v62
    %v235 = vunpack.c.h.b16 %v62
    %v236 = vunpack.c.l.b16 %v63
    %v237 = vunpack.c.h.b16 %v63
    %v238 = vunpack.c.l.b16 %v64
    %v239 = vunpack.c.h.b16 %v64
    %v240 = vunpack.c.l.b16 %v65
    %v241 = vunpack.c.h.b16 %v65
    %v242 = vunpack.c.l.b16 %v66
    %v243 = vunpack.c.h.b16 %v66
    %v244 = vunpack.c.l.b16 %v67
    %v245 = vunpack.c.h.b16 %v67
    %v246 = vunpack.c.l.b16 %v68
    %v247 = vunpack.c.h.b16 %v68
    %v248 = vunpack.c.l.b16 %v69
    %v249 = vunpack.c.h.b16 %v69
    %v250 = vunpack.c.l.b16 %v70
    %v251 = vunpack.c.h.b16 %v70
    %v252 = vunpack.c.l.b16 %v71
    %v253 = vunpack.c.h.b16 %v71
    %v254 = vunpack.c.l.b16 %v72
    %v255 = vunpack.c.h.b16 %v72
    %v256 = vunpack.c.l.b16 %v73
    %v257 = vunpack.c.h.b16 %v73
    %v258 = vunpack.c.l.b16 %v74
    %v259 = vunpack.c.h.b16 %v74
    %v260 = vunpack.c.l.b16 %v75
    %v261 = vunpack.c.h.b16 %v75
    %v262 = vunpack.c.l.b16 %v76
    %v263 = vunpack.c.h.b16 %v76
    %v264 = vunpack.c.l.b16 %v77
    %v265 = vunpack.c.h.b16 %v77
    %v266 = vunpack.c.l.b16 %v78
    %v267 = vunpack.c.h.b16 %v78
    %v268 = vunpack.c.l.b16 %v79
    %v269 = vunpack.c.h.b16 %v79
    %v270 = vunpack.c.l.b16 %v80
    %v271 = vunpack.c.h.b16 %v80
    %v272 = vunpack.c.l.b16 %v81
    %v273 = vunpack.c.h.b16 %v81
    %v274 = vunpack.c.l.b16 %v82
    %v275 = vunpack.c.h.b16 %v82
    %v276 = vunpack.c.l.b16 %v83
    %v277 = vunpack.c.h.b16 %v83
    %v278 = vunpack.c.l.b16 %v84
    %v279 = vunpack.c.h.b16 %v84
    %v280 = vunpack.c.l.b16 %v85
    %v281 = vunpack.c.h.b16 %v85
    %v282 = vunpack.c.l.b16 %v86
    %v283 = vunpack.c.h.b16 %v86
    %v284 = vunpack.c.l.b16 %v87
    %v285 = vunpack.c.h.b16 %v87
    %v286 = vunpack.c.l.b16 %v88
    %v287 = vunpack.c.h.b16 %v88
    %v288 = vunpack.c.l.b16 %v89
    %v289 = vunpack.c.h.b16 %v89
    %v290 = vunpack.c.l.b16 %v90
    %v291 = vunpack.c.h.b16 %v90
    %v292 = vunpack.c.l.b16 %v91
    %v293 = vunpack.c.h.b16 %v91
    %v294 = vunpack.c.l.b16 %v92
    %v295 = vunpack.c.h.b16 %v92
    %v296 = vunpack.c.l.b16 %v93
    %v297 = vunpack.c.h.b16 %v93
    %v298 = vpack.c.b16 %v174, %v170
    %v299 = vpack.c.b16 %v175, %v171
    %v300 = vpack.c.b16 %v176, %v172
    %v301 = vpack.c.b16 %v177, %v173
    %v302 = vpack.c.b16 %v182, %v178
    %v303 = vpack.c.b16 %v183, %v179
    %v304 = vpack.c.b16 %v184, %v180
    %v305 = vpack.c.b16 %v185, %v181
    %v306 = vpack.c.b16 %v190, %v186
    %v307 = vpack.c.b16 %v191, %v187
    %v308 = vpack.c.b16 %v192, %v188
    %v309 = vpack.c.b16 %v193, %v189
    %v310 = vpack.c.b16 %v198, %v194
    %v311 = vpack.c.b16 %v199, %v195
    %v312 = vpack.c.b16 %v200, %v196
    %v313 = vpack.c.b16 %v201, %v197
    %v314 = vpack.c.b16 %v206, %v202
    %v315 = vpack.c.b16 %v207, %v203
    %v316 = vpack.c.b16 %v208, %v204
    %v317 = vpack.c.b16 %v209, %v205
    %v318 = vpack.c.b16 %v214, %v210
    %v319 = vpack.c.b16 %v215, %v211
    %v320 = vpack.c.b16 %v216, %v212
    %v321 = vpack.c.b16 %v217, %v213
    %v322 = vpack.c.b16 %v222, %v218
    %v323 = vpack.c.b16 %v223, %v219
    %v324 = vpack.c.b16 %v224, %v220
    %v325 = vpack.c.b16 %v225, %v221
    %v326 = vpack.c.b16 %v230, %v226
    %v327 = vpack.c.b16 %v231, %v227
    %v328 = vpack.c.b16 %v232, %v228
    %v329 = vpack.c.b16 %v233, %v229
    %v330 = vpack.c.b16 %v238, %v234
    %v331 = vpack.c.b16 %v239, %v235
    %v332 = vpack.c.b16 %v240, %v236
    %v333 = vpack.c.b16 %v241, %v237
    %v334 = vpack.c.b16 %v246, %v242
    %v335 = vpack.c.b16 %v247, %v243
    %v336 = vpack.c.b16 %v248, %v244
    %v337 = vpack.c.b16 %v249, %v245
    %v338 = vpack.c.b16 %v254, %v250
    %v339 = vpack.c.b16 %v255, %v251
    %v340 = vpack.c.b16 %v256, %v252
    %v341 = vpack.c.b16 %v257, %v253
    %v342 = vpack.c.b16 %v262, %v258
    %v343 = vpack.c.b16 %v263, %v259
    %v344 = vpack.c.b16 %v264, %v260
    %v345 = vpack.c.b16 %v265, %v261
    %v346 = vpack.c.b16 %v270, %v266
    %v347 = vpack.c.b16 %v271, %v267
    %v348 = vpack.c.b16 %v272, %v268
    %v349 = vpack.c.b16 %v273, %v269
    %v350 = vpack.c.b16 %v278, %v274
    %v351 = vpack.c.b16 %v279, %v275
    %v352 = vpack.c.b16 %v280, %v276
    %v353 = vpack.c.b16 %v281, %v277
    %v354 = vpack.c.b16 %v286, %v282
    %v355 = vpack.c.b16 %v287, %v283
    %v356 = vpack.c.b16 %v288, %v284
    %v357 = vpack.c.b16 %v289, %v285
    %v358 = vpack.c.b16 %v294, %v290
    %v359 = vpack.c.b16 %v295, %v291
    %v360 = vpack.c.b16 %v296, %v292
    %v361 = vpack.c.b16 %v297, %v293
    %426 = vmatprep.subr.bf16.mxu0 %v299
    %427 = vmatpush1.bf16.msra.mxu0 %v298
    %428 = vmatprep.subr.bf16.mxu0 %v303
    %429 = vmatpush1.bf16.msra.mxu0 %v302
    %430 = vmatprep.subr.bf16.mxu0 %v307
    %431 = vmatpush1.bf16.msra.mxu0 %v306
    %432 = vmatprep.subr.bf16.mxu0 %v311
    %433 = vmatpush1.bf16.msra.mxu0 %v310
    %434 = vmatprep.subr.bf16.mxu0 %v315
    %435 = vmatpush1.bf16.msra.mxu0 %v314
    %436 = vmatprep.subr.bf16.mxu0 %v319
    %437 = vmatpush1.bf16.msra.mxu0 %v318
    %438 = vmatprep.subr.bf16.mxu0 %v323
    %439 = vmatpush1.bf16.msra.mxu0 %v322
    %440 = vmatprep.subr.bf16.mxu0 %v327
    %441 = vmatpush1.bf16.msra.mxu0 %v326
    %442 = vmatprep.subr.bf16.mxu0 %v331
    %443 = vmatpush1.bf16.msra.mxu0 %v330
    %444 = vmatprep.subr.bf16.mxu0 %v335
    %445 = vmatpush1.bf16.msra.mxu0 %v334
    %446 = vmatprep.subr.bf16.mxu0 %v339
    %447 = vmatpush1.bf16.msra.mxu0 %v338
    %448 = vmatprep.subr.bf16.mxu0 %v343
    %449 = vmatpush1.bf16.msra.mxu0 %v342
    %450 = vmatprep.subr.bf16.mxu0 %v347
    %451 = vmatpush1.bf16.msra.mxu0 %v346
    %452 = vmatprep.subr.bf16.mxu0 %v351
    %453 = vmatpush1.bf16.msra.mxu0 %v350
    %454 = vmatprep.subr.bf16.mxu0 %v355
    %455 = vmatpush1.bf16.msra.mxu0 %v354
    %456 = vmatprep.subr.bf16.mxu0 %v359
    %457 = vmatpush1.bf16.msra.mxu0 %v358
    %458 = vmatprep.mubr.bf16.mxu0 %v103
    %459 = vmatmul.mubr.bf16.gmra.mrb[0].mxu0 %v102
    %v460 = vpop.f32.mrb[0].mxu0
    %v461 = vadd.f32 0.0, %v460
    %v462 = vpop.f32.mrb[0].mxu0
    %v463 = vadd.f32 0.0, %v462
    %v464 = vpop.f32.mrb[0].mxu0
    %v465 = vadd.f32 0.0, %v464
    %v466 = vpop.f32.mrb[0].mxu0
    %v467 = vadd.f32 0.0, %v466
    %468 = vdwg.mxu0
    %469 = vmatprep.subr.bf16.mxu0 %v301
    %470 = vmatpush1.bf16.msra.mxu0 %v300
    %471 = vmatprep.subr.bf16.mxu0 %v305
    %472 = vmatpush1.bf16.msra.mxu0 %v304
    %473 = vmatprep.subr.bf16.mxu0 %v309
    %474 = vmatpush1.bf16.msra.mxu0 %v308
    %475 = vmatprep.subr.bf16.mxu0 %v313
    %476 = vmatpush1.bf16.msra.mxu0 %v312
    %477 = vmatprep.subr.bf16.mxu0 %v317
    %478 = vmatpush1.bf16.msra.mxu0 %v316
    %479 = vmatprep.subr.bf16.mxu0 %v321
    %480 = vmatpush1.bf16.msra.mxu0 %v320
    %481 = vmatprep.subr.bf16.mxu0 %v325
    %482 = vmatpush1.bf16.msra.mxu0 %v324
    %483 = vmatprep.subr.bf16.mxu0 %v329
    %484 = vmatpush1.bf16.msra.mxu0 %v328
    %485 = vmatprep.subr.bf16.mxu0 %v333
    %486 = vmatpush1.bf16.msra.mxu0 %v332
    %487 = vmatprep.subr.bf16.mxu0 %v337
    %488 = vmatpush1.bf16.msra.mxu0 %v336
    %489 = vmatprep.subr.bf16.mxu0 %v341
    %490 = vmatpush1.bf16.msra.mxu0 %v340
    %491 = vmatprep.subr.bf16.mxu0 %v345
    %492 = vmatpush1.bf16.msra.mxu0 %v344
    %493 = vmatprep.subr.bf16.mxu0 %v349
    %494 = vmatpush1.bf16.msra.mxu0 %v348
    %495 = vmatprep.subr.bf16.mxu0 %v353
    %496 = vmatpush1.bf16.msra.mxu0 %v352
    %497 = vmatprep.subr.bf16.mxu0 %v357
    %498 = vmatpush1.bf16.msra.mxu0 %v356
    %499 = vmatprep.subr.bf16.mxu0 %v361
    %500 = vmatpush1.bf16.msra.mxu0 %v360
    %501 = vmatprep.mubr.bf16.mxu0 %v103
    %502 = vmatmul.mubr.bf16.gmra.mrb[0].mxu0 %v102
    %v503 = vpop.f32.mrb[0].mxu0
    %v504 = vadd.f32 0.0, %v503
    %v505 = vpop.f32.mrb[0].mxu0
    %v506 = vadd.f32 0.0, %v505
    %v507 = vpop.f32.mrb[0].mxu0
    %v508 = vadd.f32 0.0, %v507
    %v509 = vpop.f32.mrb[0].mxu0
    %v510 = vadd.f32 0.0, %v509
    %511 = vdwg.mxu0
    %v512 = vmul.f32 %v461, 0.5
    %v513 = vmul.f32 %v465, 0.5
    %v514 = vtanh.pop %v512
    %v515 = vtanh.pop %v513
    %v516 = vmul.f32 %v514, 0.5
    %v517 = vmul.f32 %v515, 0.5
    %v518 = vadd.f32 %v516, 0.5
    %v519 = vadd.f32 %v517, 0.5
    %v520 = vtanh.pop %v504
    %v521 = vtanh.pop %v508
    %v522 = vmul.f32 %v506, 0.5
    %v523 = vmul.f32 %v510, 0.5
    %v524 = vtanh.pop %v522
    %v525 = vtanh.pop %v523
    %v526 = vmul.f32 %v524, 0.5
    %v527 = vmul.f32 %v525, 0.5
    %v528 = vadd.f32 %v526, 0.5
    %v529 = vadd.f32 %v527, 0.5
    %v530 = vmul.f32 %v463, 0.5
    %v531 = vmul.f32 %v467, 0.5
    %v532 = vtanh.pop %v530
    %v533 = vtanh.pop %v531
    %v534 = vmul.f32 %v532, 0.5
    %v535 = vmul.f32 %v533, 0.5
    %v536 = vadd.f32 %v534, 0.5
    %v537 = vadd.f32 %v535, 0.5
    %v538 = vld [vmem:[%s2] sm:$0xff]
    %v539 = vld [vmem:[%s2 + $0x8] sm:$0xff]
    %v540 = vmul.f32 %v536, %v538
    %v541 = vmul.f32 %v537, %v539
    %v542 = vmul.f32 %v518, %v520
    %v543 = vmul.f32 %v519, %v521
    %v544 = vadd.f32 %v540, %v542
    %v545 = vadd.f32 %v541, %v543
    %v546 = vtanh.pop %v544
    %v547 = vtanh.pop %v545
    %v548 = vmul.f32 %v528, %v546
    %v549 = vmul.f32 %v529, %v547
    %550 = vst [vmem:[%s3] sm:$0xff] %v548
    %551 = vst [vmem:[%s3 + $0x8] sm:$0xff] %v549
    %552 = vst [vmem:[%s4] sm:$0xff] %v544
    %553 = vst [vmem:[%s4 + $0x8] sm:$0xff] %v545
    // Predicated region
    $region18: #{_mega_lstm_step.1} parent=1 // pred_check
      _
    $region19: #{_mega_lstm_step.1} parent=1 // pred_check_branch
      %555 = sbr.rel (0) target = $region21
    $region20: #{_mega_lstm_step.1} parent=1 // pred_region
      _
    $region21: #{_mega_lstm_step.1} parent=1 // pred_fallthru
      _
    // Predicated region
    $region22: #{_mega_lstm_step.1} parent=1 // pred_check
      _
    $region23: #{_mega_lstm_step.1} parent=1 // pred_check_branch
      %557 = sbr.rel (0) target = $region25
    $region24: #{_mega_lstm_step.1} parent=1 // pred_region
      _
    $region25: #{_mega_lstm_step.1} parent=1 // pred_fallthru
      _
    // Predicated region
    $region26: #{_mega_lstm_step.1} parent=1 // pred_check
      _
    $region27: #{_mega_lstm_step.1} parent=1 // pred_check_branch
      %559 = sbr.rel (0) target = $region29
    $region28: #{_mega_lstm_step.1} parent=1 // pred_region
      _
    $region29: #{_mega_lstm_step.1} parent=1 // pred_fallthru
      _
    // Predicated region
    $region30: #{_mega_lstm_step.1} parent=1 // pred_check
      _
    $region31: #{_mega_lstm_step.1} parent=1 // pred_check_branch
      %561 = sbr.rel (0) target = $region33
    $region32: #{_mega_lstm_step.1} parent=1 // pred_region
      _
    $region33: #{_mega_lstm_step.1} parent=1 // pred_fallthru
      _
    %562 = vsyncpa [#allocation3], 1

</llo_original>
